<compile_context>
chip_gen: v7x
topology: tpu7x:2x2x1
jax: 0.10.0
libtpu: 0.0.40
codegen_flags: <defaults>
</compile_context>

<pallas_src>
import jax
import jax.numpy as jnp
from jax.experimental import pallas as pl
from jax.experimental.pallas import tpu as pltpu


# ----------------------------------------------------------------------------
# VMEM budgeting / tiling helpers
# ----------------------------------------------------------------------------
_VMEM_LIMIT_BYTES = 32 << 20  # explicit scoped-VMEM limit for both pallas_calls


def _round_up(n, m):
    return ((n + m - 1) // m) * m


def _vmem_budget_bytes():
    """Live-block budget for tile sizing. Generation-aware: v7x has 64 MiB
    physical VMEM per TensorCore (vs 128 MiB on v5e/v6e), so keep the
    simultaneously-live blocks <= ~24-28 MiB and raise the scoped limit
    explicitly via CompilerParams."""
    try:
        phys = pltpu.get_tpu_info().vmem_capacity_bytes
    except Exception:  # pragma: no cover - conservative (v7x per-TC) fallback
        phys = 64 << 20
    return min(max(phys // 2 - (8 << 20), 8 << 20), 28 << 20)


def _resident_spec(shape, index_map):
    """BlockSpec for a block whose index never changes: single-buffer it
    (double-buffering a constant block only burns VMEM)."""
    try:
        return pl.BlockSpec(shape, index_map, pipeline_mode=pl.Buffered(1))
    except Exception:  # older jax without pipeline_mode: fall back to default
        return pl.BlockSpec(shape, index_map)


def _pick_row_block(n_rows, bytes_per_row, fixed_bytes, budget):
    """Largest sublane-aligned row block fitting the VMEM budget. If no aligned
    divisor exists the caller pads the row count up (never falls back to the
    full dimension)."""
    avail = max(budget - fixed_bytes, 8 * bytes_per_row)
    cap = max(8, min(_round_up(n_rows, 8), (avail // bytes_per_row) // 8 * 8))
    if n_rows <= cap:
        return n_rows                      # single block (full dim is legal)
    for d in range(cap, 7, -8):            # largest 8-aligned divisor <= cap
        if n_rows % d == 0:
            return d
    return cap                             # caller pads rows up to a multiple


def _pick_time_chunk(S, bytes_per_step, fixed_bytes, budget):
    """Largest divisor of S whose chunk fits the VMEM budget (leading block dim
    has no alignment constraint, so any divisor is legal; worst case 1)."""
    avail = max(budget - fixed_bytes, bytes_per_step)
    cap = max(1, min(S, avail // bytes_per_step))
    best = 1
    for d in range(1, cap + 1):
        if S % d == 0:
            best = d
    return best


def _pick_batch_block(B):
    """Leading 'parallel' batch axis for the recurrence (v7x second TensorCore).
    Only split when each block keeps the per-step MXU M-dim fed (>=128 rows)."""
    if B % 2 == 0 and (B // 2) >= 128:
        return B // 2
    return B


# ----------------------------------------------------------------------------
# Kernels
# ----------------------------------------------------------------------------
def gru_input_proj_kernel(x_ref, wih_ref, bi_ref, gi_ref):
    """Hoisted input projection: gi = x @ Wih_packed + b_i.

    x_ref:  (rb, D)  f32   chunk of time-major flattened (S*B, D) inputs
    wih_ref:(D, 3H)  bf16  packed input->hidden weights (r|z|n), resident
    bi_ref: (1, 3H)  f32   folded biases [bih_r+bhh_r | bih_z+bhh_z | bih_n]
    gi_ref: (rb, 3H) bf16  output projection chunk
    """
    x = x_ref[...].astype(wih_ref.dtype)             # bf16 operands for the MXU
    acc = jnp.dot(x, wih_ref[...], preferred_element_type=jnp.float32)
    gi_ref[...] = (acc + bi_ref[...]).astype(gi_ref.dtype)


def gru_recurrent_kernel(gi_ref, whh_ref, bhn_ref, out_ref, h_last_ref, h_scr):
    """One grid step = one (batch block, time chunk) of GRU steps.

    gi_ref:     (tc, Bb, 3H) bf16  precomputed input projections (time-major)
    whh_ref:    (H, 3H)      bf16  packed hidden->hidden weights, resident
    bhn_ref:    (1, H)       f32   bhh_n only (r/z hidden biases folded into gi)
    out_ref:    (tc, Bb, H)  f32   per-timestep outputs for this chunk
    h_last_ref: (Bb, H)      f32   final hidden state (written on last t only)
    h_scr:      (Bb, H)      f32   VMEM carry for h_{t-1}, persists across t
    """
    t = pl.program_id(1)
    T_c = gi_ref.shape[0]
    Bb, H = h_scr.shape

    @pl.when(t == 0)
    def _():
        h_scr[...] = jnp.zeros_like(h_scr)

    # Hoisted broadcast (JAX doesn't CSE broadcast_in_dim inside the loop).
    bhn = jnp.broadcast_to(bhn_ref[...].astype(jnp.float32), (Bb, H))
    h0 = h_scr[...]                                   # (Bb, H) f32 carry

    def step(i, h):
        gi = gi_ref[i].astype(jnp.float32)            # per-step dense ref read
        # Fused 3-gate hidden matmul: bf16 operands, f32 accumulation.
        gh = jnp.dot(h.astype(whh_ref.dtype), whh_ref[...],
                     preferred_element_type=jnp.float32)
        # sigmoid(x) = 0.5*(tanh(0.5*x)+1): one EUP push per gate instead of two.
        r = 0.5 * (jnp.tanh(0.5 * (gi[:, 0:H] + gh[:, 0:H])) + 1.0)
        z = 0.5 * (jnp.tanh(0.5 * (gi[:, H:2 * H] + gh[:, H:2 * H])) + 1.0)
        n = jnp.tanh(gi[:, 2 * H:] + r * (gh[:, 2 * H:] + bhn))
        h_new = (1.0 - z) * n + z * h
        out_ref[i] = h_new.astype(out_ref.dtype)      # dense (Bb, H) store
        return h_new

    # fori_loop with bounded unroll keeps vreg live ranges to ~one timestep
    # while staying visible to the LLO scheduler.
    h = jax.lax.fori_loop(0, T_c, step, h0, unroll=min(T_c, 8))
    h_scr[...] = h

    @pl.when(t == pl.num_programs(1) - 1)
    def _():
        h_last_ref[...] = h.astype(h_last_ref.dtype)


# ----------------------------------------------------------------------------
# Wrapper
# ----------------------------------------------------------------------------
def simple_rnn_forward(inputs_bsd, packed, *, time_chunk=None, row_block=None,
                       batch_block=None):
    """Mirrors SimpleRNN.forward(inputs) with embedder=None, lengths=None,
    hidden=None (default GRU config).

    inputs_bsd: (B, S, D) float32 (already-embedded tokens, since embedder=None)
    packed:     dict from pack_gru_params
    returns:    {"outputs": (B, S, H), "last_hidden_state": (1, B, H)}
    """
    wih, whh = packed["wih"], packed["whh"]
    bias_i, bias_hn = packed["bias_i"], packed["bias_hn"]
    B, S, D = inputs_bsd.shape
    H = whh.shape[0]
    G = 3 * H
    budget = _vmem_budget_bytes()

    # ---- 1) Hoisted input projection over time-major flattened rows.
    x_tm = jnp.transpose(inputs_bsd, (1, 0, 2))       # (S, B, D): one-pass
    BS = S * B
    x_flat = x_tm.reshape(BS, D)

    in_fixed = wih.size * 2 + bias_i.size * 4
    in_per_row = 2 * D * 4 + 2 * G * 2 + G * 4        # x dbl-buf + gi dbl-buf + f32 acc
    rb = row_block or _pick_row_block(BS, in_per_row, in_fixed, budget)
    BS_pad = _round_up(BS, rb)
    if BS_pad != BS:
        x_flat = jnp.pad(x_flat, ((0, BS_pad - BS), (0, 0)))

    gi_flat = pl.pallas_call(
        gru_input_proj_kernel,
        out_shape=jax.ShapeDtypeStruct((BS_pad, G), jnp.bfloat16),
        grid_spec=pltpu.PrefetchScalarGridSpec(
            num_scalar_prefetch=0,
            grid=(BS_pad // rb,),
            in_specs=[
                pl.BlockSpec((rb, D), lambda i: (i, 0)),
                _resident_spec((D, G), lambda i: (0, 0)),   # wih, single-buffered
                _resident_spec((1, G), lambda i: (0, 0)),   # bias_i, single-buffered
            ],
            out_specs=pl.BlockSpec((rb, G), lambda i: (i, 0)),
        ),
        compiler_params=pltpu.CompilerParams(
            dimension_semantics=("parallel",),
            vmem_limit_bytes=_VMEM_LIMIT_BYTES,
        ),
    )(x_flat, wih, bias_i)
    gi = gi_flat[:BS].reshape(S, B, G)                # time-major (S, B, 3H)

    # ---- 2) Sequential recurrence over (batch block, time chunk) grid.
    bb = batch_block or _pick_batch_block(B)
    assert B % bb == 0, "batch_block must divide B"
    rec_fixed = (whh.size * 2 + bias_hn.size * 4      # resident weights/bias
                 + 3 * bb * H * 4                     # h carry + h_last buffers
                 + 4 * bb * G * 4)                    # per-step f32 temporaries
    rec_per_step = 2 * bb * G * 2 + 2 * bb * H * 4    # gi + out, double-buffered
    tc = time_chunk or _pick_time_chunk(S, rec_per_step, rec_fixed, budget)
    assert S % tc == 0, "time_chunk must divide S"

    out_tm, h_last = pl.pallas_call(
        gru_recurrent_kernel,
        out_shape=(
            jax.ShapeDtypeStruct((S, B, H), jnp.float32),
            jax.ShapeDtypeStruct((B, H), jnp.float32),
        ),
        grid_spec=pltpu.PrefetchScalarGridSpec(
            num_scalar_prefetch=0,
            grid=(B // bb, S // tc),
            in_specs=[
                pl.BlockSpec((tc, bb, G), lambda b, t: (t, b, 0)),   # gi chunk
                _resident_spec((H, G), lambda b, t: (0, 0)),         # whh
                _resident_spec((1, H), lambda b, t: (0, 0)),         # bhh_n
            ],
            out_specs=[
                pl.BlockSpec((tc, bb, H), lambda b, t: (t, b, 0)),   # outputs
                pl.BlockSpec((bb, H), lambda b, t: (b, 0)),          # final hidden
            ],
            scratch_shapes=[pltpu.VMEM((bb, H), jnp.float32)],
        ),
        compiler_params=pltpu.CompilerParams(
            dimension_semantics=("parallel", "arbitrary"),  # batch ||, time seq
            vmem_limit_bytes=_VMEM_LIMIT_BYTES,
        ),
    )(gi, whh, bias_hn)

    outputs = jnp.transpose(out_tm, (1, 0, 2))        # back to batch_first
    return {"outputs": outputs, "last_hidden_state": h_last[None]}


# ----------------------------------------------------------------------------
# Params (torch.nn.GRU-compatible init) and packing for the kernels
# ----------------------------------------------------------------------------
def init_gru_params(key, input_size, hidden_size):
    """Raw per-gate params (gate order r, z, n), U(-1/sqrt(H), 1/sqrt(H))."""
    k = 1.0 / jnp.sqrt(jnp.float32(hidden_size))
    k_wih, k_whh, k_bih, k_bhh = jax.random.split(key, 4)
    return {
        "wih": jax.random.uniform(k_wih, (3, input_size, hidden_size),
                                  jnp.float32, -k, k),
        "whh": jax.random.uniform(k_whh, (3, hidden_size, hidden_size),
                                  jnp.float32, -k, k),
        "bih": jax.random.uniform(k_bih, (3, hidden_size), jnp.float32, -k, k),
        "bhh": jax.random.uniform(k_bhh, (3, hidden_size), jnp.float32, -k, k),
    }


def pack_gru_params(raw):
    """Pack per-gate params into the fused lane-dense layout the kernels use.

    Weights go to bf16 (MXU-native); biases and the recurrence stay f32.
    """
    wih3, whh3, bih3, bhh3 = raw["wih"], raw["whh"], raw["bih"], raw["bhh"]
    wih = jnp.concatenate([wih3[0], wih3[1], wih3[2]], axis=1).astype(jnp.bfloat16)
    whh = jnp.concatenate([whh3[0], whh3[1], whh3[2]], axis=1).astype(jnp.bfloat16)
    # r/z biases fold (input + hidden); n keeps only bih here, bhh_n stays
    # separate because it is multiplied by r inside the recurrence.
    bias_i = jnp.concatenate(
        [bih3[0] + bhh3[0], bih3[1] + bhh3[1], bih3[2]], axis=0)[None, :]
    bias_hn = bhh3[2][None, :]
    return {"wih": wih, "whh": whh,
            "bias_i": bias_i.astype(jnp.float32),
            "bias_hn": bias_hn.astype(jnp.float32)}


# ----------------------------------------------------------------------------
# Pure-JAX references
# ----------------------------------------------------------------------------
def gru_kernel_mirror_reference(inputs_bsd, packed):
    """Pure-JAX mirror of the exact kernel pipeline (bf16 weights / bf16 gi,
    f32 accumulation and gate math) for tight-tolerance verification."""
    wih, whh = packed["wih"], packed["whh"]
    bias_i, bias_hn = packed["bias_i"], packed["bias_hn"]
    B, S, D = inputs_bsd.shape
    H = whh.shape[0]
    x = inputs_bsd.astype(jnp.bfloat16)
    gi = (jnp.einsum("bsd,dg->bsg", x, wih,
                     preferred_element_type=jnp.float32)
          + bias_i).astype(jnp.bfloat16)

    def step(h, gi_t):
        gi_t = gi_t.astype(jnp.float32)
        gh = jnp.dot(h.astype(jnp.bfloat16), whh,
                     preferred_element_type=jnp.float32)
        r = 0.5 * (jnp.tanh(0.5 * (gi_t[:, 0:H] + gh[:, 0:H])) + 1.0)
        z = 0.5 * (jnp.tanh(0.5 * (gi_t[:, H:2 * H] + gh[:, H:2 * H])) + 1.0)
        n = jnp.tanh(gi_t[:, 2 * H:] + r * (gh[:, 2 * H:] + bias_hn))
        h_new = (1.0 - z) * n + z * h
        return h_new, h_new

    h0 = jnp.zeros((B, H), jnp.float32)
    hT, outs = jax.lax.scan(step, h0, jnp.transpose(gi, (1, 0, 2)))
    return jnp.transpose(outs, (1, 0, 2)), hT[None]


def gru_reference_f32(inputs_bsd, raw):
    """Full-f32 reference with the same math as torch.nn.GRU (batch_first)."""
    wih, whh, bih, bhh = raw["wih"], raw["whh"], raw["bih"], raw["bhh"]
    B, S, D = inputs_bsd.shape
    H = whh.shape[-1]

    def step(h, x_t):
        r = jax.nn.sigmoid(x_t @ wih[0] + bih[0] + h @ whh[0] + bhh[0])
        z = jax.nn.sigmoid(x_t @ wih[1] + bih[1] + h @ whh[1] + bhh[1])
        n = jnp.tanh(x_t @ wih[2] + bih[2] + r * (h @ whh[2] + bhh[2]))
        h_new = (1.0 - z) * n + z * h
        return h_new, h_new

    h0 = jnp.zeros((B, H), jnp.float32)
    hT, outs = jax.lax.scan(step, h0, jnp.transpose(inputs_bsd, (1, 0, 2)))
    return jnp.transpose(outs, (1, 0, 2)), hT[None]


if __name__ == "__main__":
    B, S, D, H = 2, 16, 16, 32  # batch, seq_len, input_size, hidden_size

    key = jax.random.PRNGKey(0)
    k_params, k_inputs = jax.random.split(key)
    raw = init_gru_params(k_params, D, H)
    packed = pack_gru_params(raw)
    # "inputs" plays the role of already-embedded tokens (embedder=None).
    inputs = jax.random.normal(k_inputs, (B, S, D), jnp.float32)

    # time_chunk=8 -> 2 chunks: exercises the VMEM hidden-state carry across grid steps.
    out = simple_rnn_forward(inputs, packed, time_chunk=8)
    jax.block_until_ready(out)

    assert out["outputs"].shape == (B, S, H)
    assert out["last_hidden_state"].shape == (1, B, H)

    # Tight check vs a pure-JAX mirror of the exact (bf16-weight) kernel pipeline.
    mir_out, mir_hid = gru_kernel_mirror_reference(inputs, packed)
    assert jnp.allclose(out["outputs"], mir_out, rtol=5e-3, atol=5e-3)
    assert jnp.allclose(out["last_hidden_state"], mir_hid, rtol=5e-3, atol=5e-3)

    # Loose sanity check vs full-f32 torch.nn.GRU math (gap == bf16 weight quantization).
    ref_out, ref_hid = gru_reference_f32(inputs, raw)
    assert jnp.allclose(out["outputs"], ref_out, rtol=5e-2, atol=5e-2)
    assert jnp.allclose(out["last_hidden_state"], ref_hid, rtol=5e-2, atol=5e-2)

    print("KERNEL_OK")
</pallas_src>

<mosaic_0001>
module attributes {stable_mosaic.version = 11 : i64} {
  func.func @gru_input_proj_kernel(%arg0: i32, %arg1: memref<32x16xf32, #tpu.memory_space<vmem>>, %arg2: memref<16x96xbf16, #tpu.memory_space<vmem>>, %arg3: memref<1x96xf32, #tpu.memory_space<vmem>>, %arg4: memref<32x96xbf16, #tpu.memory_space<vmem>>) attributes {dimension_semantics = [#tpu.dimension_semantics<parallel>], iteration_bounds = array<i64: 1>, scalar_prefetch = 0 : i64, scratch_operands = 0 : i64, tpu.core_type = #tpu.core_type<tc>, window_params = [{transform_indices = @transform_0, window_bounds = array<i64: 32, 16>}, {pipeline_mode = #tpu.pipeline_mode<synchronous>, transform_indices = @transform_1, window_bounds = array<i64: 16, 96>}, {pipeline_mode = #tpu.pipeline_mode<synchronous>, transform_indices = @transform_2, window_bounds = array<i64: 1, 96>}, {transform_indices = @transform_3, window_bounds = array<i64: 32, 96>}]} {
    %c0 = arith.constant 0 : index
    %c0_0 = arith.constant 0 : index
    %0 = vector.load %arg1[%c0, %c0_0] : memref<32x16xf32, #tpu.memory_space<vmem>>, vector<32x16xf32>
    %1 = arith.truncf %0 : vector<32x16xf32> to vector<32x16xbf16>
    %c0_1 = arith.constant 0 : index
    %c0_2 = arith.constant 0 : index
    %2 = vector.load %arg2[%c0_1, %c0_2] : memref<16x96xbf16, #tpu.memory_space<vmem>>, vector<16x96xbf16>
    %cst = arith.constant dense<0.000000e+00> : vector<32x96xf32>
    %3 = tpu.matmul %1, %2, %cst {dimension_numbers = #tpu.dot_dimension_numbers<[1], [0], [0], [1], [0, 0, 1, 1], [], []>} : vector<32x16xbf16>, vector<16x96xbf16>, vector<32x96xf32> -> vector<32x96xf32>
    %c0_3 = arith.constant 0 : index
    %c0_4 = arith.constant 0 : index
    %4 = vector.load %arg3[%c0_3, %c0_4] : memref<1x96xf32, #tpu.memory_space<vmem>>, vector<1x96xf32>
    %5 = vector.broadcast %4 : vector<1x96xf32> to vector<32x96xf32>
    %6 = arith.addf %3, %5 : vector<32x96xf32>
    %7 = arith.truncf %6 : vector<32x96xf32> to vector<32x96xbf16>
    %c0_5 = arith.constant 0 : index
    %c0_6 = arith.constant 0 : index
    %8 = vector.load %arg4[%c0_5, %c0_6] : memref<32x96xbf16, #tpu.memory_space<vmem>>, vector<32x96xbf16>
    tpu.vector_store %arg4[%c0_5, %c0_6], %7 {strides = array<i32>} : memref<32x96xbf16, #tpu.memory_space<vmem>>, vector<32x96xbf16>,
    return
  }
  func.func @transform_0(%arg0: i32) -> (i32, i32) {
    %c0_i32 = arith.constant 0 : i32
    %c0_i32_0 = arith.constant 0 : i32
    return %arg0, %c0_i32 : i32, i32
  }
  func.func @transform_1(%arg0: i32) -> (i32, i32) {
    %c0_i32 = arith.constant 0 : i32
    %c0_i32_0 = arith.constant 0 : i32
    %c0_i32_1 = arith.constant 0 : i32
    return %c0_i32, %c0_i32_0 : i32, i32
  }
  func.func @transform_2(%arg0: i32) -> (i32, i32) {
    %c0_i32 = arith.constant 0 : i32
    %c0_i32_0 = arith.constant 0 : i32
    %c0_i32_1 = arith.constant 0 : i32
    return %c0_i32, %c0_i32_0 : i32, i32
  }
  func.func @transform_3(%arg0: i32) -> (i32, i32) {
    %c0_i32 = arith.constant 0 : i32
    %c0_i32_0 = arith.constant 0 : i32
    return %arg0, %c0_i32 : i32, i32
  }
}

</mosaic_0001>

<llo_original>
// kernel: tpu_custom_call.1
$region0: #{tpu_custom_call.1}
  #allocation0 [shape = 'u32[]', space=smem, size = 0x4, offset = 0x4, fixed_abs, tag = 'smem constant byte address 0x4 - core index']
  #allocation1 [shape = 'u32[144,128]{1,0:T(1,128)}', space=vmem, size = 0x12000, scoped, tag = 'internal scratch']
  %s0 = inlined_call_operand.vmem [shape: f32[32,16], index: 0, kind: input, shape index: {}]
  %s1 = inlined_call_operand.vmem [shape: bf16[16,96], index: 1, kind: input, shape index: {}]
  %s2 = inlined_call_operand.vmem [shape: f32[1,96], index: 2, kind: input, shape index: {}]
  %s3 = inlined_call_operand.hbm [shape: bf16[32,96], index: 3, kind: output, shape index: {}]
  %s4 = sld [smem:[#allocation0]]
  $region22: #{tpu_custom_call.1} parent=0
    _
  %s6 = ssub.s32 1, %s4
  %s7 = scalar_select 0, %s6, %s4
  $region1: #{tpu_custom_call.1} parent=0
    #allocation2 [shape = 'u8[8192]{0}', space=vmem, size = 0x2000, scoped, tag = 'output window, operand 0, single buffered']
    #allocation3 [shape = 's32[1]{0}', space=sflag, size = 0x4, scoped, tag = 'scoped memory for tpu_custom_call.1']
    %8 = vsyncpa [#allocation3], 0
    // Predicated region
    $region2: #{tpu_custom_call.1} parent=1 // pred_check
      _
    $region3: #{tpu_custom_call.1} parent=1 // pred_check_branch
      %10 = sbr.rel (0) target = $region5
    $region4: #{tpu_custom_call.1} parent=1 // pred_region
      _
    $region5: #{tpu_custom_call.1} parent=1 // pred_fallthru
      _
    // Predicated region
    $region6: #{tpu_custom_call.1} parent=1 // pred_check
      _
    $region7: #{tpu_custom_call.1} parent=1 // pred_check_branch
      %12 = sbr.rel (0) target = $region9
    $region8: #{tpu_custom_call.1} parent=1 // pred_region
      _
    $region9: #{tpu_custom_call.1} parent=1 // pred_fallthru
      _
    // Predicated region
    $region10: #{tpu_custom_call.1} parent=1 // pred_check
      _
    $region11: #{tpu_custom_call.1} parent=1 // pred_check_branch
      %14 = sbr.rel (0) target = $region13
    $region12: #{tpu_custom_call.1} parent=1 // pred_region
      _
    $region13: #{tpu_custom_call.1} parent=1 // pred_fallthru
      _
    %v16 = vld [vmem:[%s0] sm:$0xff]
    %v17 = vld [vmem:[%s0 + $0x8] sm:$0xff]
    %v18 = vld [vmem:[%s0 + $0x10] sm:$0xff]
    %v19 = vld [vmem:[%s0 + $0x18] sm:$0xff]
    %v20 = vpack.c.bf16 %v17, %v16
    %v21 = vpack.c.bf16 %v19, %v18
    %v22 = vld [vmem:[%s1] sm:$0xf]
    %v23 = vld [vmem:[%s1 + $0x4] sm:$0xf]
    %v24 = vld [vmem:[%s2] sm:$0x1]
    %v26 = vlaneseq
    %v27 = vshrl.u32 %v26, 7
    %v28 = vsub.s32 0, %v27
    %v29 = vrot.slane %v24, %v28
    %v33 = vunpack.c.l.b16 %v22
    %v34 = vunpack.c.l.b16 %v23
    %v35 = vpack.c.b16 %v34, %v33
    %vm37 = vcmask 130048
    %v39 = vsel %vm37, %v20, 0
    %v42 = vsel %vm37, %v21, 0
    %44 = vmatprep.subr.bf16.mxu0 0
    %45 = vmatpush1.bf16.msra.mxu0 %v35
    %46 = vmatprep.subr.bf16.mxu0 0
    %47 = vmatpush1.bf16.msra.mxu0 0
    %48 = vmatprep.subr.bf16.mxu0 0
    %49 = vmatpush1.bf16.msra.mxu0 0
    %50 = vmatprep.subr.bf16.mxu0 0
    %51 = vmatpush1.bf16.msra.mxu0 0
    %52 = vmatprep.subr.bf16.mxu0 0
    %53 = vmatpush1.bf16.msra.mxu0 0
    %54 = vmatprep.subr.bf16.mxu0 0
    %55 = vmatpush1.bf16.msra.mxu0 0
    %56 = vmatprep.subr.bf16.mxu0 0
    %57 = vmatpush1.bf16.msra.mxu0 0
    %58 = vmatprep.subr.bf16.mxu0 0
    %59 = vmatpush1.bf16.msra.mxu0 0
    %60 = vmatprep.subr.bf16.mxu0 0
    %61 = vmatpush1.bf16.msra.mxu0 0
    %62 = vmatprep.subr.bf16.mxu0 0
    %63 = vmatpush1.bf16.msra.mxu0 0
    %64 = vmatprep.subr.bf16.mxu0 0
    %65 = vmatpush1.bf16.msra.mxu0 0
    %66 = vmatprep.subr.bf16.mxu0 0
    %67 = vmatpush1.bf16.msra.mxu0 0
    %68 = vmatprep.subr.bf16.mxu0 0
    %69 = vmatpush1.bf16.msra.mxu0 0
    %70 = vmatprep.subr.bf16.mxu0 0
    %71 = vmatpush1.bf16.msra.mxu0 0
    %72 = vmatprep.subr.bf16.mxu0 0
    %73 = vmatpush1.bf16.msra.mxu0 0
    %74 = vmatprep.subr.bf16.mxu0 0
    %75 = vmatpush1.bf16.msra.mxu0 0
    %76 = vmatprep.mubr.bf16.mxu0 0
    %77 = vmatmul.mubr.bf16.gmra.mrb[0].mxu0 %v39
    %v78 = vpop.f32.mrb[0].mxu0
    %v79 = vadd.f32 %v29, %v78
    %v80 = vpop.f32.mrb[0].mxu0
    %v81 = vpop.f32.mrb[0].mxu0
    %v82 = vadd.f32 %v29, %v81
    %v83 = vpop.f32.mrb[0].mxu0
    %84 = vmatprep.mubr.bf16.mxu0 0
    %85 = vmatmul.mubr.bf16.gmra.mrb[0].mxu0 %v42
    %v86 = vpop.f32.mrb[0].mxu0
    %v87 = vadd.f32 %v29, %v86
    %v88 = vpop.f32.mrb[0].mxu0
    %v89 = vpop.f32.mrb[0].mxu0
    %v90 = vadd.f32 %v29, %v89
    %v91 = vpop.f32.mrb[0].mxu0
    %92 = vdwg.mxu0
    %v93 = vpack.c.bf16 %v82, %v79
    %v94 = vpack.c.bf16 %v90, %v87
    %v97 = vunpack.c.l.b16 %v93
    %v98 = vunpack.c.h.b16 %v93
    %v99 = vunpack.c.l.b16 %v94
    %v100 = vunpack.c.h.b16 %v94
    %v101 = vpack.c.b16 %v97, %v97
    %v102 = vpack.c.b16 %v98, %v98
    %v103 = vpack.c.b16 %v99, %v99
    %v104 = vpack.c.b16 %v100, %v100
    %vm109 = vcmask 781312
    %110 = vst.msk [vmem:[#allocation2] sm:$0xf] %vm109, %v101
    %111 = vst.msk [vmem:[#allocation2 + $0x4] sm:$0xf] %vm109, %v102
    %112 = vst.msk [vmem:[#allocation2 + $0x8] sm:$0xf] %vm109, %v103
    %113 = vst.msk [vmem:[#allocation2 + $0xc] sm:$0xf] %vm109, %v104
    // Predicated region
    $region14: #{tpu_custom_call.1} parent=1 // pred_check
      _
    $region15: #{tpu_custom_call.1} parent=1 // pred_check_branch
      %115 = sbr.rel (0) target = $region17
    $region16: #{tpu_custom_call.1} parent=1 // pred_region
      %s117 = ssub.s32 256, 256
      %118 = vsyncadd [#allocation3], %s117
      %s119 = sshll.u32 [#allocation2], 4
      %s120 = int_to_ptr.vmem [resolvable:$true] %s119
      %125 = dma.vmem_to_hbm [thread:$0]  %s120, 256, %s3, [#allocation3], 64, 64, 4
    $region17: #{tpu_custom_call.1} parent=1 // pred_fallthru
      _
    // Predicated region
    $region18: #{tpu_custom_call.1} parent=1 // pred_check
      _
    $region19: #{tpu_custom_call.1} parent=1 // pred_check_branch
      %127 = sbr.rel (0) target = $region21
    $region20: #{tpu_custom_call.1} parent=1 // pred_region
      %128 = dma.done [#allocation3], 256
    $region21: #{tpu_custom_call.1} parent=1 // pred_fallthru
      _
    %129 = vsyncpa [#allocation3], 1

</llo_original>
